<compile_context>
chip_gen: v6e
topology: v6e:2x2x1
jax: 0.10.0
libtpu: 0.0.40
codegen_flags: <defaults>
</compile_context>

<pallas_src>
import jax
import jax.numpy as jnp
from jax import lax
from jax.experimental import pallas as pl
from jax.experimental.pallas import tpu as pltpu


def _round_up(x, m):
    return (x + m - 1) // m * m


# ---------------------------------------------------------------------------
# Stage 1: gather + segment-sum + L2 normalize  ->  (P_pad, D) portfolio embs
# ---------------------------------------------------------------------------
def _portf_emb_kernel(a_idx_ref,   # SMEM (N,)    int32  scalar-prefetched asset ids
                      p_idx_ref,   # VMEM (1, N)  int32  portfolio id per item
                      feat_hbm,    # ANY  (A, D)  f32    feat_embedding.weight (HBM)
                      portf_ref,   # VMEM (P_pad, D) f32 normalized portfolio embs
                      feat_buf,    # VMEM (N, D)  f32    scratch: gathered rows
                      dma_sem):    # scalar DMA semaphore
    N, D = feat_buf.shape
    P = portf_ref.shape[0]

    # 1) Data-dependent row gather: feat_buf[i, :] = feat_table[asset_indices[i], :]
    #    Issue all N row DMAs, then drain them (copies overlap in flight).
    #    TODO(synk): out-of-range asset indices are not range-checked here
    #    (PyTorch nn.Embedding would raise).
    @pl.loop(0, N)
    def _start(i):
        pltpu.make_async_copy(
            feat_hbm.at[pl.ds(a_idx_ref[i], 1)],
            feat_buf.at[pl.ds(i, 1)],
            dma_sem,
        ).start()

    @pl.loop(0, N)
    def _wait(i):
        pltpu.make_async_copy(
            feat_hbm.at[pl.ds(0, 1)],
            feat_buf.at[pl.ds(0, 1)],
            dma_sem,
        ).wait()

    # 2) Segment-sum as membership matmul (MXU): M[p, i] = [portfolio_indices[i] == p]
    p_iota = lax.broadcasted_iota(jnp.int32, (P, N), 0)
    memb = (p_iota == p_idx_ref[...]).astype(jnp.float32)           # (P, N) of {0,1}
    portf = jnp.dot(memb, feat_buf[...], preferred_element_type=jnp.float32)

    # 3) L2Norm aggregation (rsqrt -> EUP slot; eps guards empty/padded portfolios).
    sumsq = jnp.sum(portf * portf, axis=-1, keepdims=True)
    portf_ref[...] = portf * lax.rsqrt(sumsq + 1e-24)


# ---------------------------------------------------------------------------
# Stage 2: scores = portf_emb @ target_table.T, tiled over the asset axis
# ---------------------------------------------------------------------------
def _scores_kernel(portf_ref,    # VMEM (P_pad, D)      f32 (resident across tiles)
                   targ_t_ref,   # VMEM (D, TILE_A)     f32 target-table tile
                   out_ref):     # VMEM (P_pad, TILE_A) f32 scores tile
    out_ref[...] = jnp.dot(portf_ref[...], targ_t_ref[...],
                           preferred_element_type=jnp.float32)


def embedding_recommender_forward(asset_indices, portfolio_indices,
                                  feat_table, target_table_t,
                                  num_portfolios, tile_a=512):
    """Forward pass of EmbeddingRecommender (L2Norm aggregation).

    asset_indices, portfolio_indices : (N,) int
    feat_table     : (A, D) f32  feat_embedding.weight
    target_table_t : (D, A) f32  target_embedding.weight stored ONCE in lane-dense
                     transposed layout (do not re-transpose per call)
    Returns scores of shape (num_portfolios, A).
    """
    N = int(asset_indices.shape[0])
    A, D = feat_table.shape
    assert target_table_t.shape == (D, A)
    P = int(num_portfolios)
    P_pad = _round_up(max(P, 8), 8)          # keep sublane dim a multiple of 8

    a_idx = asset_indices.astype(jnp.int32)                    # -> SMEM (prefetch)
    p_idx_row = portfolio_indices.astype(jnp.int32).reshape(1, N)

    # ---- stage 1: normalized portfolio embeddings (P_pad, D) ----------------
    s1_block_bytes = 4 * (N * D + P_pad * D + 2 * N)
    portf = pl.pallas_call(
        _portf_emb_kernel,
        out_shape=jax.ShapeDtypeStruct((P_pad, D), jnp.float32),
        grid_spec=pltpu.PrefetchScalarGridSpec(
            num_scalar_prefetch=1,
            grid=(1,),
            in_specs=[
                pl.BlockSpec((1, N), lambda i, a_sc: (0, 0)),   # portfolio ids
                pl.BlockSpec(memory_space=pl.ANY),              # feat table stays in HBM
            ],
            out_specs=pl.BlockSpec((P_pad, D), lambda i, a_sc: (0, 0)),
            scratch_shapes=[
                pltpu.VMEM((N, D), jnp.float32),
                pltpu.SemaphoreType.DMA(()),
            ],
        ),
        compiler_params=pltpu.CompilerParams(
            dimension_semantics=("arbitrary",),
            vmem_limit_bytes=max(4 << 20, 4 * s1_block_bytes),
        ),
    )(a_idx, p_idx_row, feat_table)

    # ---- stage 2: scores matmul, tiled (and megacore-parallel) over A -------
    tile_a = min(int(tile_a), A)
    if tile_a < A:
        tile_a = max(128, (tile_a // 128) * 128)   # lane-dense, (8,128)-aligned tiles
    grid_a = pl.cdiv(A, tile_a)
    # double-buffered targ/out tiles + resident portf block (+ headroom)
    s2_block_bytes = 4 * (2 * D * tile_a + 2 * P_pad * tile_a + 2 * P_pad * D)
    scores = pl.pallas_call(
        _scores_kernel,
        out_shape=jax.ShapeDtypeStruct((P_pad, A), jnp.float32),
        grid_spec=pltpu.PrefetchScalarGridSpec(
            num_scalar_prefetch=0,
            grid=(grid_a,),
            in_specs=[
                pl.BlockSpec((P_pad, D), lambda j: (0, 0)),
                pl.BlockSpec((D, tile_a), lambda j: (0, j)),
            ],
            out_specs=pl.BlockSpec((P_pad, tile_a), lambda j: (0, j)),
        ),
        compiler_params=pltpu.CompilerParams(
            dimension_semantics=("parallel",),
            vmem_limit_bytes=max(4 << 20, min(64 << 20, 2 * s2_block_bytes)),
        ),
    )(portf, target_table_t)

    return scores[:P]


if __name__ == "__main__":
    num_assets = 512          # A (tiled by the scores kernel)
    emb_dim = 32              # D
    num_portfolios = 4        # P
    assets_per_portfolio = 5
    N = num_portfolios * assets_per_portfolio

    key = jax.random.PRNGKey(0)
    k_feat, k_targ, k_idx = jax.random.split(key, 3)

    # nn.Embedding default init ~ N(0, 1)
    feat_table = jax.random.normal(k_feat, (num_assets, emb_dim), dtype=jnp.float32)
    target_table = jax.random.normal(k_targ, (num_assets, emb_dim), dtype=jnp.float32)
    # Target table kept once in lane-dense (D, A) layout as model state
    # (not re-transposed per forward call).
    target_table_t = jnp.asarray(target_table.T)

    asset_indices = jax.random.randint(k_idx, (N,), 0, num_assets, dtype=jnp.int32)
    portfolio_indices = jnp.repeat(jnp.arange(num_portfolios, dtype=jnp.int32),
                                   assets_per_portfolio)

    scores = embedding_recommender_forward(asset_indices, portfolio_indices,
                                           feat_table, target_table_t,
                                           num_portfolios, tile_a=128)
    jax.block_until_ready(scores)

    # reference (plain JAX, same math as the PyTorch forward)
    feat_emb = feat_table[asset_indices]                                     # (N, D)
    portf = jnp.zeros((num_portfolios, emb_dim), jnp.float32).at[
        portfolio_indices].add(feat_emb)                                     # (P, D)
    portf = portf / jnp.linalg.norm(portf, axis=-1, keepdims=True)
    ref = portf @ target_table.T                                             # (P, A)
    assert scores.shape == (num_portfolios, num_assets)
    assert jnp.allclose(scores, ref, atol=1e-4, rtol=1e-4), (
        float(jnp.max(jnp.abs(scores - ref))))

    print("KERNEL_OK")
</pallas_src>

<mosaic_0001>
module attributes {stable_mosaic.version = 11 : i64} {
  func.func @_portf_emb_kernel(%arg0: i32, %arg1: memref<20xi32, #tpu.memory_space<smem>>, %arg2: memref<1x20xi32, #tpu.memory_space<vmem>>, %arg3: memref<512x32xf32, #tpu.memory_space<any>>, %arg4: memref<8x32xf32, #tpu.memory_space<vmem>>, %arg5: memref<20x32xf32, #tpu.memory_space<vmem>>, %arg6: memref<!tpu.dma_semaphore, #tpu.memory_space<semaphore_mem>>) attributes {dimension_semantics = [#tpu.dimension_semantics<arbitrary>], iteration_bounds = array<i64: 1>, scalar_prefetch = 1 : i64, scratch_operands = 2 : i64, tpu.core_type = #tpu.core_type<tc>, window_params = [{pipeline_mode = #tpu.pipeline_mode<synchronous>, transform_indices = @transform_0, window_bounds = array<i64: 1, 20>}, {}, {pipeline_mode = #tpu.pipeline_mode<synchronous>, transform_indices = @transform_2, window_bounds = array<i64: 8, 32>}]} {
    %c0_i32 = arith.constant 0 : i32
    %c20_i32 = arith.constant 20 : i32
    %0 = arith.addi %c0_i32, %c20_i32 : i32
    %c1_i32 = arith.constant 1 : i32
    scf.for %arg7 = %c0_i32 to %0 step %c1_i32  : i32 {
      %c1_i32_11 = arith.constant 1 : i32
      %19 = arith.muli %arg7, %c1_i32_11 : i32
      %c0_i32_12 = arith.constant 0 : i32
      %20 = arith.addi %c0_i32_12, %19 : i32
      %21 = arith.index_cast %20 : i32 to index
      %22 = memref.load %arg1[%21] : memref<20xi32, #tpu.memory_space<smem>>
      %c0_i32_13 = arith.constant 0 : i32
      %23 = tpu.memref_slice %arg3[%22, %c0_i32_13] : memref<512x32xf32, #tpu.memory_space<any>> -> memref<1x32xf32, #tpu.memory_space<any>>
      %c0_i32_14 = arith.constant 0 : i32
      %24 = tpu.memref_slice %arg5[%20, %c0_i32_14] : memref<20x32xf32, #tpu.memory_space<vmem>> -> memref<1x32xf32, #tpu.memory_space<vmem>>
      tpu.enqueue_dma source(%23 : memref<1x32xf32, #tpu.memory_space<any>>) target(%24 : memref<1x32xf32, #tpu.memory_space<vmem>>) target_semaphore(%arg6 : memref<!tpu.dma_semaphore, #tpu.memory_space<semaphore_mem>>)
    }
    %c20_i32_0 = arith.constant 20 : i32
    %c0_i32_1 = arith.constant 0 : i32
    %c20_i32_2 = arith.constant 20 : i32
    %1 = arith.addi %c0_i32_1, %c20_i32_2 : i32
    %c1_i32_3 = arith.constant 1 : i32
    scf.for %arg7 = %c0_i32_1 to %1 step %c1_i32_3  : i32 {
      %c0_i32_11 = arith.constant 0 : i32
      %c0_i32_12 = arith.constant 0 : i32
      %19 = tpu.memref_slice %arg3[%c0_i32_11, %c0_i32_12] : memref<512x32xf32, #tpu.memory_space<any>> -> memref<1x32xf32, #tpu.memory_space<any>>
      %c0_i32_13 = arith.constant 0 : i32
      %c0_i32_14 = arith.constant 0 : i32
      %20 = tpu.memref_slice %arg5[%c0_i32_13, %c0_i32_14] : memref<20x32xf32, #tpu.memory_space<vmem>> -> memref<1x32xf32, #tpu.memory_space<vmem>>
      tpu.wait_dma2 semaphore(%arg6 : memref<!tpu.dma_semaphore, #tpu.memory_space<semaphore_mem>>) src(%19 : memref<1x32xf32, #tpu.memory_space<any>>) dst(%20 : memref<1x32xf32, #tpu.memory_space<vmem>>)
    }
    %2 = tpu.iota {dimensions = array<i32: 0>} : vector<8x20xi32>
    %c0 = arith.constant 0 : index
    %c0_4 = arith.constant 0 : index
    %3 = vector.load %arg2[%c0, %c0_4] : memref<1x20xi32, #tpu.memory_space<vmem>>, vector<1x20xi32>
    %4 = vector.broadcast %3 : vector<1x20xi32> to vector<8x20xi32>
    %5 = arith.cmpi eq, %2, %4 : vector<8x20xi32>
    %6 = arith.extui %5 : vector<8x20xi1> to vector<8x20xi32>
    %7 = arith.sitofp %6 : vector<8x20xi32> to vector<8x20xf32>
    %c0_5 = arith.constant 0 : index
    %c0_6 = arith.constant 0 : index
    %8 = vector.load %arg5[%c0_5, %c0_6] : memref<20x32xf32, #tpu.memory_space<vmem>>, vector<20x32xf32>
    %cst = arith.constant dense<0.000000e+00> : vector<8x32xf32>
    %9 = tpu.matmul %7, %8, %cst {dimension_numbers = #tpu.dot_dimension_numbers<[1], [0], [0], [1], [0, 0, 1, 1], [], []>} : vector<8x20xf32>, vector<20x32xf32>, vector<8x32xf32> -> vector<8x32xf32>
    %10 = arith.mulf %9, %9 : vector<8x32xf32>
    %cst_7 = arith.constant dense<0.000000e+00> : vector<8xf32>
    %11 = vector.multi_reduction <add>, %10, %cst_7 [1] : vector<8x32xf32> to vector<8xf32>
    %12 = vector.shape_cast %11 : vector<8xf32> to vector<8x1xf32>
    %cst_8 = arith.constant 1.000000e-24 : f32
    %13 = vector.broadcast %cst_8 : f32 to vector<8x1xf32>
    %14 = arith.addf %12, %13 : vector<8x1xf32>
    %15 = math.rsqrt %14 : vector<8x1xf32>
    %16 = vector.broadcast %15 : vector<8x1xf32> to vector<8x32xf32>
    %17 = arith.mulf %9, %16 : vector<8x32xf32>
    %c0_9 = arith.constant 0 : index
    %c0_10 = arith.constant 0 : index
    %18 = vector.load %arg4[%c0_9, %c0_10] : memref<8x32xf32, #tpu.memory_space<vmem>>, vector<8x32xf32>
    tpu.vector_store %arg4[%c0_9, %c0_10], %17 {strides = array<i32>} : memref<8x32xf32, #tpu.memory_space<vmem>>, vector<8x32xf32>,
    return
  }
  func.func @transform_0(%arg0: i32, %arg1: memref<20xi32, #tpu.memory_space<smem>>) -> (i32, i32) {
    %c0_i32 = arith.constant 0 : i32
    %c0_i32_0 = arith.constant 0 : i32
    %c0_i32_1 = arith.constant 0 : i32
    return %c0_i32, %c0_i32_0 : i32, i32
  }
  func.func @transform_2(%arg0: i32, %arg1: memref<20xi32, #tpu.memory_space<smem>>) -> (i32, i32) {
    %c0_i32 = arith.constant 0 : i32
    %c0_i32_0 = arith.constant 0 : i32
    %c0_i32_1 = arith.constant 0 : i32
    return %c0_i32, %c0_i32_0 : i32, i32
  }
}

</mosaic_0001>

<llo_original>
// kernel: tpu_custom_call.1
$region0: #{tpu_custom_call.1}
  #allocation0 [shape = 'u32[]', space=smem, size = 0x4, offset = 0x4, fixed_abs, tag = 'smem constant byte address 0x4 - core index']
  #allocation1 [shape = 'u32[144,128]{1,0:T(1,128)}', space=vmem, size = 0x12000, scoped, tag = 'internal scratch']
  #allocation2 [shape = 'f32[20,32]{1,0:T(8,128)}', space=vmem, size = 0x3000, scoped, tag = 'scratch operand']
  #allocation3 [shape = 's32[1]{0}', space=sflag, size = 0x4, scoped, tag = 'scratch operand']
  #allocation4 [shape = 's32[1]{0}', space=sflag, size = 0x4, scoped, tag = 'scoped memory for tpu_custom_call.1']
  #allocation5 [shape = 'u8[512]{0}', space=smem, size = 0x200, scoped, tag = 'prefetched SMEM operand 0']
  #allocation8 [shape = 's32[]', space=sflag, size = 0x4, offset = 0, fixed_abs, tag = 'sflag constant byte address 0x0 - dummy sync flag']
  %s0 = inlined_call_operand.vmem [shape: s32[20], index: 0, kind: input, shape index: {}]
  %s1 = inlined_call_operand.vmem [shape: s32[1,20], index: 1, kind: input, shape index: {}]
  %s2 = inlined_call_operand.vmem [shape: f32[512,32], index: 2, kind: input, shape index: {}]
  %s3 = inlined_call_operand.hbm [shape: f32[8,32], index: 3, kind: output, shape index: {}]
  %s4 = sld [smem:[#allocation0]]
  $region58: #{tpu_custom_call.1} parent=0
    _
  %s6 = ssub.s32 1, %s4
  %s7 = scalar_select 0, %s6, %s4
  %s8 = sshll.u32 %s0, 4
  %s9 = int_to_ptr.vmem [resolvable:$true] %s8
  %11 = dma.vmem_to_smem %s9, 16, [#allocation5], [#allocation4]
  %12 = dma.done [#allocation4], 16
  %13 = sfence
  $region1: #{tpu_custom_call.1} parent=0
    #allocation6 [shape = 'u8[4096]{0}', space=vmem, size = 0x1000, scoped, tag = 'output window, operand 0, single buffered']
    #allocation7 [shape = 's32[1]{0}', space=sflag, size = 0x4, scoped, tag = 'scoped memory for tpu_custom_call.1']
    %14 = vsyncpa [#allocation7], 0
    // Predicated region
    $region2: #{tpu_custom_call.1} parent=1 // pred_check
      _
    $region3: #{tpu_custom_call.1} parent=1 // pred_check_branch
      %16 = sbr.rel (0) target = $region5
    $region4: #{tpu_custom_call.1} parent=1 // pred_region
      _
    $region5: #{tpu_custom_call.1} parent=1 // pred_fallthru
      _
    loop: start=0, step=1, limit=20
    $region6: #{tpu_custom_call.1} parent=1 // loop_pre_header
      _
    $region7: #{tpu_custom_call.1} parent=1 // loop_header
      %s18 = sphi 0, %s22
      %p19 = scmp.ge.s32.totalorder %s18, 20
    $region8: #{tpu_custom_call.1} parent=1 // loop_header_branch
      %21 = sbr.rel (%p19) target = $region12
    $region9: #{tpu_custom_call.1} parent=1 // loop_body
      %s23 = sld [smem:[#allocation5 + %s18]]
      %s24 = scalar_lea.vmem %s2, %s23
      %s25 = scalar_lea.vmem [#allocation2], %s18
      %p27 = scmp.lt.u32.totalorder 1, 8
      %p28 = pneg %p27
      // Predicated region
      $region13: #{tpu_custom_call.1} parent=9 // pred_check
        _
      $region14: #{tpu_custom_call.1} parent=9 // pred_check_branch
        %30 = sbr.rel (%p27) target = $region16
      $region15: #{tpu_custom_call.1} parent=9 // pred_region
        %s46 = sand.u32 1, 7
        %p47 = scmp.eq.s32.totalorder %s46, 0
        %p48 = pneg %p47
        // Predicated region
        $region28: #{tpu_custom_call.1} parent=15 // pred_check
          _
        $region29: #{tpu_custom_call.1} parent=15 // pred_check_branch
          %50 = sbr.rel (%p47) target = $region31
        $region30: #{tpu_custom_call.1} parent=15 // pred_region
          %s51 = sand.u32 1, 7
          %s52 = ssub.s32 1, %s51
          %s53 = scalar_lea.vmem %s24, %s52
          %s54 = ssub.s32 1, %s51
          %s55 = scalar_lea.vmem %s25, %s54 [#allocation2]
          %s56 = sshll.u32 1, %s51
          %s57 = ssub.s32 %s56, 1
          loop: start=0, step=1, limit=1
          $region32: #{tpu_custom_call.1} parent=30 // loop_pre_header
            _
          $region33: #{tpu_custom_call.1} parent=30 // loop_header
            %s59 = sphi 0, %s63
            %p60 = scmp.ge.s32.totalorder %s59, 1
            %s64 = sphi %s53, %s53
            %s65 = sphi %s55, %s55
          $region34: #{tpu_custom_call.1} parent=30 // loop_header_branch
            %62 = sbr.rel (%p60) target = $region38
          $region35: #{tpu_custom_call.1} parent=30 // loop_body
            %v66 = vld [vmem:[%s64] sm:%s57]
            %67 = vst [vmem:[%s65] sm:%s57] %v66
          $region36: #{tpu_custom_call.1} parent=30 // loop_footer
            %s63 = sadd.s32 1, %s59
          $region37: #{tpu_custom_call.1} parent=30 // loop_footer_branch
            %58 = sbr.rel target = $region33
          $region38: #{tpu_custom_call.1} parent=30 // loop_exit
            _
        $region31: #{tpu_custom_call.1} parent=15 // pred_fallthru
          _
      $region16: #{tpu_custom_call.1} parent=9 // pred_fallthru
        _
      // Predicated region
      $region17: #{tpu_custom_call.1} parent=9 // pred_check
        %p31 = pneg %p27
      $region18: #{tpu_custom_call.1} parent=9 // pred_check_branch
        %33 = sbr.rel (%p31) target = $region20
      $region19: #{tpu_custom_call.1} parent=9 // pred_region
        %s34 = sshll.u32 1, 1
        %s35 = ssub.s32 %s34, 1
        loop: start=0, step=1, limit=1
        $region21: #{tpu_custom_call.1} parent=19 // loop_pre_header
          _
        $region22: #{tpu_custom_call.1} parent=19 // loop_header
          %s37 = sphi 0, %s41
          %p38 = scmp.ge.s32.totalorder %s37, 1
          %s42 = sphi %s24, %s24
          %s43 = sphi %s25, %s25
        $region23: #{tpu_custom_call.1} parent=19 // loop_header_branch
          %40 = sbr.rel (%p38) target = $region27
        $region24: #{tpu_custom_call.1} parent=19 // loop_body
          %v44 = vld [vmem:[%s42] sm:%s35]
          %45 = vst [vmem:[%s43] sm:%s35] %v44
        $region25: #{tpu_custom_call.1} parent=19 // loop_footer
          %s41 = sadd.s32 1, %s37
        $region26: #{tpu_custom_call.1} parent=19 // loop_footer_branch
          %36 = sbr.rel target = $region22
        $region27: #{tpu_custom_call.1} parent=19 // loop_exit
          _
      $region20: #{tpu_custom_call.1} parent=9 // pred_fallthru
        _
      // Predicated region
      $region39: #{tpu_custom_call.1} parent=9 // pred_check
        _
      $region40: #{tpu_custom_call.1} parent=9 // pred_check_branch
        %70 = sbr.rel (0) target = $region42
      $region41: #{tpu_custom_call.1} parent=9 // pred_region
        %71 = vsyncadd [#allocation3], 16
      $region42: #{tpu_custom_call.1} parent=9 // pred_fallthru
        _
    $region10: #{tpu_custom_call.1} parent=1 // loop_footer
      %s22 = sadd.s32 1, %s18
    $region11: #{tpu_custom_call.1} parent=1 // loop_footer_branch
      %17 = sbr.rel target = $region7
    $region12: #{tpu_custom_call.1} parent=1 // loop_exit
      _
    loop: start=0, step=1, limit=20
    $region43: #{tpu_custom_call.1} parent=1 // loop_pre_header
      _
    $region44: #{tpu_custom_call.1} parent=1 // loop_header
      %s73 = sphi 0, %s77
      %p74 = scmp.ge.s32.totalorder %s73, 20
    $region45: #{tpu_custom_call.1} parent=1 // loop_header_branch
      %76 = sbr.rel (%p74) target = $region49
    $region46: #{tpu_custom_call.1} parent=1 // loop_body
      %s78 = smul.u32 1, 1
      %s79 = sshll.u32 %s78, 4
      %80 = dma.done [#allocation3], %s79
    $region47: #{tpu_custom_call.1} parent=1 // loop_footer
      %s77 = sadd.s32 1, %s73
    $region48: #{tpu_custom_call.1} parent=1 // loop_footer_branch
      %72 = sbr.rel target = $region44
    $region49: #{tpu_custom_call.1} parent=1 // loop_exit
      _
    %v81 = vlaneseq
    %v82 = vshrl.u32 %v81, 7
    %v83 = vld [vmem:[%s1] sm:$0x1]
    %v84 = vlaneseq
    %v85 = vshrl.u32 %v84, 7
    %v86 = vsub.s32 0, %v85
    %v87 = vrot.slane %v83, %v86
    %vm88 = vcmp.eq.s32.totalorder %v82, %v87
    %v89 = vsel %vm88, 1, 0
    %v90 = vcvt.s32.f32 %v89
    %v91 = vld [vmem:[#allocation2] sm:$0xff]
    %v92 = vld [vmem:[#allocation2 + $0x8] sm:$0xff]
    %v93 = vld [vmem:[#allocation2 + $0x10] sm:$0xf]
    %vm94 = vcmask 162816
    %v96 = vsel %vm94, %v90, 0
    %vm98 = vcmask 1043456
    %v100 = vsel %vm98, %v93, 0
    %102 = vmatprep.subr.mxu0 0.0
    %103 = vmatpush1.msra.mxu0 0.0
    %104 = vmatprep.subr.mxu0 0.0
    %105 = vmatpush1.msra.mxu0 0.0
    %106 = vmatprep.subr.mxu0 0.0
    %107 = vmatpush1.msra.mxu0 0.0
    %108 = vmatprep.subr.mxu0 0.0
    %109 = vmatpush1.msra.mxu0 0.0
    %110 = vmatprep.subr.mxu0 0.0
    %111 = vmatpush1.msra.mxu0 0.0
    %112 = vmatprep.subr.mxu0 0.0
    %113 = vmatpush1.msra.mxu0 0.0
    %114 = vmatprep.subr.mxu0 0.0
    %115 = vmatpush1.msra.mxu0 0.0
    %116 = vmatprep.subr.mxu0 0.0
    %117 = vmatpush1.msra.mxu0 0.0
    %118 = vmatprep.subr.mxu0 0.0
    %119 = vmatpush1.msra.mxu0 0.0
    %120 = vmatprep.subr.mxu0 0.0
    %121 = vmatpush1.msra.mxu0 0.0
    %122 = vmatprep.subr.mxu0 0.0
    %123 = vmatpush1.msra.mxu0 0.0
    %124 = vmatprep.subr.mxu0 0.0
    %125 = vmatpush1.msra.mxu0 0.0
    %126 = vmatprep.subr.mxu0 0.0
    %127 = vmatpush1.msra.mxu0 0.0
    %128 = vmatprep.subr.mxu0 0.0
    %129 = vmatpush1.msra.mxu0 %v100
    %130 = vmatprep.subr.mxu0 0.0
    %131 = vmatpush1.msra.mxu0 %v92
    %132 = vmatprep.subr.mxu0 0.0
    %133 = vmatpush1.msra.mxu0 %v91
    %134 = vmatprep.subr.mxu0 0.0
    %135 = vmatpush2.msra.mxu0 0.0
    %136 = vmatprep.subr.mxu0 0.0
    %137 = vmatpush2.msra.mxu0 0.0
    %138 = vmatprep.subr.mxu0 0.0
    %139 = vmatpush2.msra.mxu0 0.0
    %140 = vmatprep.subr.mxu0 0.0
    %141 = vmatpush2.msra.mxu0 0.0
    %142 = vmatprep.subr.mxu0 0.0
    %143 = vmatpush2.msra.mxu0 0.0
    %144 = vmatprep.subr.mxu0 0.0
    %145 = vmatpush2.msra.mxu0 0.0
    %146 = vmatprep.subr.mxu0 0.0
    %147 = vmatpush2.msra.mxu0 0.0
    %148 = vmatprep.subr.mxu0 0.0
    %149 = vmatpush2.msra.mxu0 0.0
    %150 = vmatprep.subr.mxu0 0.0
    %151 = vmatpush2.msra.mxu0 0.0
    %152 = vmatprep.subr.mxu0 0.0
    %153 = vmatpush2.msra.mxu0 0.0
    %154 = vmatprep.subr.mxu0 0.0
    %155 = vmatpush2.msra.mxu0 0.0
    %156 = vmatprep.subr.mxu0 0.0
    %157 = vmatpush2.msra.mxu0 0.0
    %158 = vmatprep.subr.mxu0 0.0
    %159 = vmatpush2.msra.mxu0 0.0
    %160 = vmatprep.subr.mxu0 0.0
    %161 = vmatpush2.msra.mxu0 0.0
    %162 = vmatprep.subr.mxu0 0.0
    %163 = vmatpush2.msra.mxu0 0.0
    %164 = vmatprep.subr.mxu0 0.0
    %165 = vmatpush2.msra.mxu0 0.0
    %166 = vmatprep.mubr.f32.mxu0 0.0
    %167 = vmatmul.mubr.f32.gmra.mxu0 %v96
    %v168 = vpop.f32.mrf.mxu0
    %v169 = vadd.f32 0.0, %v168
    %v170 = vpop.f32.mrf.mxu0
    %171 = vdwg.mxu0
    %v172 = vmul.f32 %v169, %v169
    %vm173 = vcmask 261120
    %v174 = vsel %vm173, %v172, 0.0
    %175 = vadd.xlane.f32.xlu0 %v174
    %v176 = vpop.xlane.xlu0 %175
    %v177 = vadd.f32 %v176, 1e-24
    %v178 = vrsqrt.pop %v177
    %v179 = vmul.f32 %v169, %v178
    %180 = vst.msk [vmem:[#allocation6] sm:$0xff] %vm173, %v179
    // Predicated region
    $region50: #{tpu_custom_call.1} parent=1 // pred_check
      _
    $region51: #{tpu_custom_call.1} parent=1 // pred_check_branch
      %182 = sbr.rel (0) target = $region53
    $region52: #{tpu_custom_call.1} parent=1 // pred_region
      %s184 = ssub.s32 128, 128
      %185 = vsyncadd [#allocation7], %s184
      %s187 = sshll.u32 [#allocation6], 4
      %s188 = int_to_ptr.vmem [resolvable:$true] %s187
      %190 = dma.vmem_to_hbm [thread:$0]  %s188, 128, %s3, [#allocation7]
    $region53: #{tpu_custom_call.1} parent=1 // pred_fallthru
      _
    // Predicated region
    $region54: #{tpu_custom_call.1} parent=1 // pred_check
      _
    $region55: #{tpu_custom_call.1} parent=1 // pred_check_branch
      %192 = sbr.rel (0) target = $region57
    $region56: #{tpu_custom_call.1} parent=1 // pred_region
      %193 = dma.done [#allocation7], 128
    $region57: #{tpu_custom_call.1} parent=1 // pred_fallthru
      _
    %194 = vsyncpa [#allocation7], 1
  %195 = vsyncmov [#allocation3]
  %s196 = vpop.sfrf %195
  %p197 = scmp.eq.s32.totalorder %s196, 0
  %p198 = pneg %p197
  %200 = shalt.err (%p198)

</llo_original>
